<compile_context>
chip_gen: v7x
topology: tpu7x:2x2x1
jax: 0.10.0
libtpu: 0.0.40
codegen_flags: <defaults>
</compile_context>

<pallas_src>
import jax
import jax.numpy as jnp
from jax.experimental import pallas as pl
from jax.experimental.pallas import tpu as pltpu


def _round_up(x, m):
    return (x + m - 1) // m * m


def gin_kernel(eps_ref, adj_ref, feat_src_ref, feat_dst_ref,
               w1_ref, b1_ref, w2_ref, b2_ref,
               out_ref, acc_ref, deg_ref):
    """Grid = (dst_tile i, src_tile k); k is the reduction axis."""
    k = pl.program_id(1)

    @pl.when(k == 0)
    def _init():
        acc_ref[...] = jnp.zeros_like(acc_ref)
        deg_ref[...] = jnp.zeros_like(deg_ref)

    # adj streamed as bf16 (0/1 values are exact); accumulate in f32.
    adj = adj_ref[...].astype(jnp.float32)
    acc_ref[...] += jnp.dot(adj, feat_src_ref[...],
                            preferred_element_type=jnp.float32)
    # fused in-degree accumulation (avoids a second HBM pass over adj)
    deg_ref[...] += jnp.sum(adj, axis=1, keepdims=True)

    @pl.when(k == pl.num_programs(1) - 1)
    def _finalize():
        eps = eps_ref[0, 0]
        deg = deg_ref[...]
        deg_inv = jnp.where(deg > 0.0, 1.0 / jnp.maximum(deg, 1.0), 0.0)
        neigh = acc_ref[...] * deg_inv                      # isolated nodes -> 0
        rst = (1.0 + eps) * feat_dst_ref[...] + neigh
        # MLP layer 1: Linear(F, 2F) + relu
        h = jnp.dot(rst, w1_ref[...],
                    preferred_element_type=jnp.float32) + b1_ref[...]
        h = jnp.maximum(h, 0.0)
        # MLP layer 2: Linear(2F, O_pad) + relu (padded cols are zero weights)
        o = jnp.dot(h, w2_ref[...],
                    preferred_element_type=jnp.float32) + b2_ref[...]
        out_ref[...] = jnp.maximum(o, 0.0)


def gin_conv(adj, feat, eps, w1, b1, w2, b2, *, tile=512):
    """adj:[N,N], feat:[N,F], eps:scalar, w1:[F,2F], b1:[2F], w2:[2F,O], b2:[O]."""
    n, f = feat.shape
    hidden = w1.shape[1]
    out_feats = w2.shape[1]

    # ---- padding / tiling (generation-friendly: tiles <= 512 keep VMEM small) ----
    n_pad = _round_up(n, 128)
    tm = tk = min(tile, n_pad)
    n_pad = _round_up(n_pad, tm)
    o_pad = _round_up(out_feats, 128)            # lane-dense output & W2 N-dim

    adj_p = jnp.zeros((n_pad, n_pad), jnp.bfloat16).at[:n, :n].set(
        adj.astype(jnp.bfloat16))
    feat_p = jnp.zeros((n_pad, f), jnp.float32).at[:n, :].set(
        feat.astype(jnp.float32))
    w1_p = w1.astype(jnp.float32)
    b1_p = b1.astype(jnp.float32).reshape(1, hidden)
    w2_p = jnp.zeros((hidden, o_pad), jnp.float32).at[:, :out_feats].set(
        w2.astype(jnp.float32))
    b2_p = jnp.zeros((1, o_pad), jnp.float32).at[0, :out_feats].set(
        b2.astype(jnp.float32))
    eps_arr = jnp.asarray(eps, jnp.float32).reshape(1, 1)

    grid = (n_pad // tm, n_pad // tk)

    # VMEM budget: double-buffered streamed operands + resident weights + scratch.
    vmem_bytes = (
        2 * tm * tk * 2            # adj tiles (bf16)
        + 2 * tk * f * 4           # feat (src rows)
        + 2 * tm * f * 4           # feat (dst rows)
        + 2 * tm * o_pad * 4       # output tile
        + (f * hidden + hidden + hidden * o_pad + o_pad) * 4
        + tm * f * 4 + tm * 4      # accumulator scratch
    )
    vmem_limit = int(min(max(2 * vmem_bytes, 16 << 20), 48 << 20))

    cost = pl.CostEstimate(
        flops=2 * n_pad * n_pad * f
        + 2 * n_pad * f * hidden
        + 2 * n_pad * hidden * o_pad,
        transcendentals=0,
        bytes_accessed=n_pad * n_pad * 2
        + 2 * n_pad * f * 4
        + n_pad * o_pad * 4
        + (f * hidden + hidden * o_pad) * 4,
    )

    out_p = pl.pallas_call(
        gin_kernel,
        out_shape=jax.ShapeDtypeStruct((n_pad, o_pad), jnp.float32),
        grid=grid,
        in_specs=[
            pl.BlockSpec(memory_space=pltpu.MemorySpace.SMEM),      # eps (1,1)
            pl.BlockSpec((tm, tk), lambda i, k: (i, k)),            # adj tile
            pl.BlockSpec((tk, f), lambda i, k: (k, 0)),             # feat (src rows)
            pl.BlockSpec((tm, f), lambda i, k: (i, 0)),             # feat (dst rows)
            pl.BlockSpec((f, hidden), lambda i, k: (0, 0)),         # W1 (resident)
            pl.BlockSpec((1, hidden), lambda i, k: (0, 0)),         # b1
            pl.BlockSpec((hidden, o_pad), lambda i, k: (0, 0)),     # W2 (resident)
            pl.BlockSpec((1, o_pad), lambda i, k: (0, 0)),          # b2
        ],
        out_specs=pl.BlockSpec((tm, o_pad), lambda i, k: (i, 0)),
        scratch_shapes=[
            pltpu.VMEM((tm, f), jnp.float32),   # neigh accumulator
            pltpu.VMEM((tm, 1), jnp.float32),   # in-degree accumulator
        ],
        compiler_params=pltpu.CompilerParams(
            dimension_semantics=("parallel", "arbitrary"),
            vmem_limit_bytes=vmem_limit,
        ),
        cost_estimate=cost,
    )(eps_arr, adj_p, feat_p, feat_p, w1_p, b1_p, w2_p, b2_p)

    return out_p[:n, :out_feats]


def gin_conv_ref(adj, feat, eps, w1, b1, w2, b2):
    deg = jnp.sum(adj, axis=1, keepdims=True)
    deg_inv = jnp.where(deg > 0, 1.0 / deg, 0.0)
    neigh = (adj @ feat) * deg_inv
    rst = (1.0 + eps) * feat + neigh
    h = jax.nn.relu(rst @ w1 + b1)
    return jax.nn.relu(h @ w2 + b2)


if __name__ == "__main__":
    key = jax.random.PRNGKey(0)
    N = 16          # nodes
    IN_FEATS = 32
    HIDDEN = 2 * IN_FEATS
    OUT_FEATS = 8

    k_adj, k_feat, k_w1, k_b1, k_w2, k_b2 = jax.random.split(key, 6)

    # deterministic small graph: random directed edges, no self loops
    adj = (jax.random.uniform(k_adj, (N, N)) < 0.3).astype(jnp.float32)
    adj = adj * (1.0 - jnp.eye(N, dtype=jnp.float32))

    feat = jax.random.normal(k_feat, (N, IN_FEATS), dtype=jnp.float32)

    # PyTorch Linear-style uniform init bounds (deterministic, synthetic)
    bound1 = 1.0 / (IN_FEATS ** 0.5)
    w1 = jax.random.uniform(k_w1, (IN_FEATS, HIDDEN), minval=-bound1, maxval=bound1)
    b1 = jax.random.uniform(k_b1, (HIDDEN,), minval=-bound1, maxval=bound1)
    bound2 = 1.0 / (HIDDEN ** 0.5)
    w2 = jax.random.uniform(k_w2, (HIDDEN, OUT_FEATS), minval=-bound2, maxval=bound2)
    b2 = jax.random.uniform(k_b2, (OUT_FEATS,), minval=-bound2, maxval=bound2)

    eps = jnp.float32(0.0)  # init_eps = 0

    out = gin_conv(adj, feat, eps, w1, b1, w2, b2)
    out = jax.block_until_ready(out)

    ref = gin_conv_ref(adj, feat, eps, w1, b1, w2, b2)
    assert out.shape == (N, OUT_FEATS)
    assert jnp.allclose(out, ref, atol=1e-5, rtol=1e-5), float(
        jnp.max(jnp.abs(out - ref)))

    print("KERNEL_OK")
</pallas_src>

<mosaic_0001>
module attributes {stable_mosaic.version = 11 : i64} {
  func.func @gin_kernel(%arg0: i32, %arg1: i32, %arg2: memref<1x1xf32, #tpu.memory_space<smem>>, %arg3: memref<128x128xbf16, #tpu.memory_space<vmem>>, %arg4: memref<128x32xf32, #tpu.memory_space<vmem>>, %arg5: memref<128x32xf32, #tpu.memory_space<vmem>>, %arg6: memref<32x64xf32, #tpu.memory_space<vmem>>, %arg7: memref<1x64xf32, #tpu.memory_space<vmem>>, %arg8: memref<64x128xf32, #tpu.memory_space<vmem>>, %arg9: memref<1x128xf32, #tpu.memory_space<vmem>>, %arg10: memref<128x128xf32, #tpu.memory_space<vmem>>, %arg11: memref<128x32xf32, #tpu.memory_space<vmem>>, %arg12: memref<128x1xf32, #tpu.memory_space<vmem>>) attributes {dimension_semantics = [#tpu.dimension_semantics<parallel>, #tpu.dimension_semantics<arbitrary>], iteration_bounds = array<i64: 1, 1>, scalar_prefetch = 0 : i64, scratch_operands = 2 : i64, tpu.core_type = #tpu.core_type<tc>, window_params = [{transform_indices = @transform_0, window_bounds = array<i64: 1, 1>}, {transform_indices = @transform_1, window_bounds = array<i64: 128, 128>}, {transform_indices = @transform_2, window_bounds = array<i64: 128, 32>}, {transform_indices = @transform_3, window_bounds = array<i64: 128, 32>}, {pipeline_mode = #tpu.pipeline_mode<synchronous>, transform_indices = @transform_4, window_bounds = array<i64: 32, 64>}, {pipeline_mode = #tpu.pipeline_mode<synchronous>, transform_indices = @transform_5, window_bounds = array<i64: 1, 64>}, {pipeline_mode = #tpu.pipeline_mode<synchronous>, transform_indices = @transform_6, window_bounds = array<i64: 64, 128>}, {pipeline_mode = #tpu.pipeline_mode<synchronous>, transform_indices = @transform_7, window_bounds = array<i64: 1, 128>}, {transform_indices = @transform_8, window_bounds = array<i64: 128, 128>}]} {
    %c0_i32 = arith.constant 0 : i32
    %0 = arith.cmpi eq, %arg1, %c0_i32 : i32
    %1 = arith.extui %0 : i1 to i32
    %c0_i32_0 = arith.constant 0 : i32
    %2 = arith.cmpi ne, %1, %c0_i32_0 : i32
    scf.if %2 {
      %cst_15 = arith.constant 0.000000e+00 : f32
      %18 = vector.broadcast %cst_15 : f32 to vector<128x32xf32>
      %c0_16 = arith.constant 0 : index
      %c0_17 = arith.constant 0 : index
      %19 = vector.load %arg11[%c0_16, %c0_17] : memref<128x32xf32, #tpu.memory_space<vmem>>, vector<128x32xf32>
      tpu.vector_store %arg11[%c0_16, %c0_17], %18 {strides = array<i32>} : memref<128x32xf32, #tpu.memory_space<vmem>>, vector<128x32xf32>,
      %cst_18 = arith.constant 0.000000e+00 : f32
      %20 = vector.broadcast %cst_18 : f32 to vector<128x1xf32>
      %c0_19 = arith.constant 0 : index
      %c0_20 = arith.constant 0 : index
      %21 = vector.load %arg12[%c0_19, %c0_20] : memref<128x1xf32, #tpu.memory_space<vmem>>, vector<128x1xf32>
      tpu.vector_store %arg12[%c0_19, %c0_20], %20 {strides = array<i32>} : memref<128x1xf32, #tpu.memory_space<vmem>>, vector<128x1xf32>,
    } else {
    }
    %c0 = arith.constant 0 : index
    %c0_1 = arith.constant 0 : index
    %3 = vector.load %arg3[%c0, %c0_1] : memref<128x128xbf16, #tpu.memory_space<vmem>>, vector<128x128xbf16>
    %4 = arith.extf %3 : vector<128x128xbf16> to vector<128x128xf32>
    %c0_2 = arith.constant 0 : index
    %c0_3 = arith.constant 0 : index
    %5 = vector.load %arg11[%c0_2, %c0_3] : memref<128x32xf32, #tpu.memory_space<vmem>>, vector<128x32xf32>
    %c0_4 = arith.constant 0 : index
    %c0_5 = arith.constant 0 : index
    %6 = vector.load %arg4[%c0_4, %c0_5] : memref<128x32xf32, #tpu.memory_space<vmem>>, vector<128x32xf32>
    %cst = arith.constant dense<0.000000e+00> : vector<128x32xf32>
    %7 = tpu.matmul %4, %6, %cst {dimension_numbers = #tpu.dot_dimension_numbers<[1], [0], [0], [1], [0, 0, 1, 1], [], []>} : vector<128x128xf32>, vector<128x32xf32>, vector<128x32xf32> -> vector<128x32xf32>
    %8 = arith.addf %5, %7 : vector<128x32xf32>
    %c0_6 = arith.constant 0 : index
    %c0_7 = arith.constant 0 : index
    %9 = vector.load %arg11[%c0_6, %c0_7] : memref<128x32xf32, #tpu.memory_space<vmem>>, vector<128x32xf32>
    tpu.vector_store %arg11[%c0_6, %c0_7], %8 {strides = array<i32>} : memref<128x32xf32, #tpu.memory_space<vmem>>, vector<128x32xf32>,
    %c0_8 = arith.constant 0 : index
    %c0_9 = arith.constant 0 : index
    %10 = vector.load %arg12[%c0_8, %c0_9] : memref<128x1xf32, #tpu.memory_space<vmem>>, vector<128x1xf32>
    %cst_10 = arith.constant dense<0.000000e+00> : vector<128xf32>
    %11 = vector.multi_reduction <add>, %4, %cst_10 [1] : vector<128x128xf32> to vector<128xf32>
    %12 = vector.shape_cast %11 : vector<128xf32> to vector<128x1xf32>
    %13 = arith.addf %10, %12 : vector<128x1xf32>
    %c0_11 = arith.constant 0 : index
    %c0_12 = arith.constant 0 : index
    %14 = vector.load %arg12[%c0_11, %c0_12] : memref<128x1xf32, #tpu.memory_space<vmem>>, vector<128x1xf32>
    tpu.vector_store %arg12[%c0_11, %c0_12], %13 {strides = array<i32>} : memref<128x1xf32, #tpu.memory_space<vmem>>, vector<128x1xf32>,
    %c0_i32_13 = arith.constant 0 : i32
    %15 = arith.cmpi eq, %arg1, %c0_i32_13 : i32
    %16 = arith.extui %15 : i1 to i32
    %c0_i32_14 = arith.constant 0 : i32
    %17 = arith.cmpi ne, %16, %c0_i32_14 : i32
    scf.if %17 {
      %c0_15 = arith.constant 0 : index
      %c0_16 = arith.constant 0 : index
      %18 = memref.load %arg2[%c0_15, %c0_16] : memref<1x1xf32, #tpu.memory_space<smem>>
      %c0_17 = arith.constant 0 : index
      %c0_18 = arith.constant 0 : index
      %19 = vector.load %arg12[%c0_17, %c0_18] : memref<128x1xf32, #tpu.memory_space<vmem>>, vector<128x1xf32>
      %cst_19 = arith.constant 0.000000e+00 : f32
      %20 = vector.broadcast %cst_19 : f32 to vector<128x1xf32>
      %21 = arith.cmpf ogt, %19, %20 : vector<128x1xf32>
      %cst_20 = arith.constant 1.000000e+00 : f32
      %22 = vector.broadcast %cst_20 : f32 to vector<128x1xf32>
      %23 = arith.maximumf %19, %22 : vector<128x1xf32>
      %cst_21 = arith.constant 1.000000e+00 : f32
      %24 = vector.broadcast %cst_21 : f32 to vector<128x1xf32>
      %25 = arith.divf %24, %23 : vector<128x1xf32>
      %cst_22 = arith.constant 0.000000e+00 : f32
      %26 = vector.broadcast %cst_22 : f32 to vector<128x1xf32>
      %27 = arith.select %21, %25, %26 : vector<128x1xi1>, vector<128x1xf32>
      %c0_23 = arith.constant 0 : index
      %c0_24 = arith.constant 0 : index
      %28 = vector.load %arg11[%c0_23, %c0_24] : memref<128x32xf32, #tpu.memory_space<vmem>>, vector<128x32xf32>
      %29 = vector.broadcast %27 : vector<128x1xf32> to vector<128x32xf32>
      %30 = arith.mulf %28, %29 : vector<128x32xf32>
      %cst_25 = arith.constant 1.000000e+00 : f32
      %31 = arith.addf %cst_25, %18 : f32
      %c0_26 = arith.constant 0 : index
      %c0_27 = arith.constant 0 : index
      %32 = vector.load %arg5[%c0_26, %c0_27] : memref<128x32xf32, #tpu.memory_space<vmem>>, vector<128x32xf32>
      %33 = vector.broadcast %31 : f32 to vector<128x32xf32>
      %34 = arith.mulf %33, %32 : vector<128x32xf32>
      %35 = arith.addf %34, %30 : vector<128x32xf32>
      %c0_28 = arith.constant 0 : index
      %c0_29 = arith.constant 0 : index
      %36 = vector.load %arg6[%c0_28, %c0_29] : memref<32x64xf32, #tpu.memory_space<vmem>>, vector<32x64xf32>
      %cst_30 = arith.constant dense<0.000000e+00> : vector<128x64xf32>
      %37 = tpu.matmul %35, %36, %cst_30 {dimension_numbers = #tpu.dot_dimension_numbers<[1], [0], [0], [1], [0, 0, 1, 1], [], []>} : vector<128x32xf32>, vector<32x64xf32>, vector<128x64xf32> -> vector<128x64xf32>
      %c0_31 = arith.constant 0 : index
      %c0_32 = arith.constant 0 : index
      %38 = vector.load %arg7[%c0_31, %c0_32] : memref<1x64xf32, #tpu.memory_space<vmem>>, vector<1x64xf32>
      %39 = vector.broadcast %38 : vector<1x64xf32> to vector<128x64xf32>
      %40 = arith.addf %37, %39 : vector<128x64xf32>
      %cst_33 = arith.constant 0.000000e+00 : f32
      %41 = vector.broadcast %cst_33 : f32 to vector<128x64xf32>
      %42 = arith.maximumf %40, %41 : vector<128x64xf32>
      %c0_34 = arith.constant 0 : index
      %c0_35 = arith.constant 0 : index
      %43 = vector.load %arg8[%c0_34, %c0_35] : memref<64x128xf32, #tpu.memory_space<vmem>>, vector<64x128xf32>
      %cst_36 = arith.constant dense<0.000000e+00> : vector<128x128xf32>
      %44 = tpu.matmul %42, %43, %cst_36 {dimension_numbers = #tpu.dot_dimension_numbers<[1], [0], [0], [1], [0, 0, 1, 1], [], []>} : vector<128x64xf32>, vector<64x128xf32>, vector<128x128xf32> -> vector<128x128xf32>
      %c0_37 = arith.constant 0 : index
      %c0_38 = arith.constant 0 : index
      %45 = vector.load %arg9[%c0_37, %c0_38] : memref<1x128xf32, #tpu.memory_space<vmem>>, vector<1x128xf32>
      %46 = vector.broadcast %45 : vector<1x128xf32> to vector<128x128xf32>
      %47 = arith.addf %44, %46 : vector<128x128xf32>
      %cst_39 = arith.constant 0.000000e+00 : f32
      %48 = vector.broadcast %cst_39 : f32 to vector<128x128xf32>
      %49 = arith.maximumf %47, %48 : vector<128x128xf32>
      %c0_40 = arith.constant 0 : index
      %c0_41 = arith.constant 0 : index
      %50 = vector.load %arg10[%c0_40, %c0_41] : memref<128x128xf32, #tpu.memory_space<vmem>>, vector<128x128xf32>
      tpu.vector_store %arg10[%c0_40, %c0_41], %49 {strides = array<i32>} : memref<128x128xf32, #tpu.memory_space<vmem>>, vector<128x128xf32>,
    } else {
    }
    return
  }
  func.func @transform_0(%arg0: i32, %arg1: i32) -> (i32, i32) {
    %c0_i32 = arith.constant 0 : i32
    %c0_i32_0 = arith.constant 0 : i32
    %c0_i32_1 = arith.constant 0 : i32
    return %c0_i32, %c0_i32_0 : i32, i32
  }
  func.func @transform_1(%arg0: i32, %arg1: i32) -> (i32, i32) {
    %c0_i32 = arith.constant 0 : i32
    return %arg0, %arg1 : i32, i32
  }
  func.func @transform_2(%arg0: i32, %arg1: i32) -> (i32, i32) {
    %c0_i32 = arith.constant 0 : i32
    %c0_i32_0 = arith.constant 0 : i32
    return %arg1, %c0_i32 : i32, i32
  }
  func.func @transform_3(%arg0: i32, %arg1: i32) -> (i32, i32) {
    %c0_i32 = arith.constant 0 : i32
    %c0_i32_0 = arith.constant 0 : i32
    return %arg0, %c0_i32 : i32, i32
  }
  func.func @transform_4(%arg0: i32, %arg1: i32) -> (i32, i32) {
    %c0_i32 = arith.constant 0 : i32
    %c0_i32_0 = arith.constant 0 : i32
    %c0_i32_1 = arith.constant 0 : i32
    return %c0_i32, %c0_i32_0 : i32, i32
  }
  func.func @transform_5(%arg0: i32, %arg1: i32) -> (i32, i32) {
    %c0_i32 = arith.constant 0 : i32
    %c0_i32_0 = arith.constant 0 : i32
    %c0_i32_1 = arith.constant 0 : i32
    return %c0_i32, %c0_i32_0 : i32, i32
  }
  func.func @transform_6(%arg0: i32, %arg1: i32) -> (i32, i32) {
    %c0_i32 = arith.constant 0 : i32
    %c0_i32_0 = arith.constant 0 : i32
    %c0_i32_1 = arith.constant 0 : i32
    return %c0_i32, %c0_i32_0 : i32, i32
  }
  func.func @transform_7(%arg0: i32, %arg1: i32) -> (i32, i32) {
    %c0_i32 = arith.constant 0 : i32
    %c0_i32_0 = arith.constant 0 : i32
    %c0_i32_1 = arith.constant 0 : i32
    return %c0_i32, %c0_i32_0 : i32, i32
  }
  func.func @transform_8(%arg0: i32, %arg1: i32) -> (i32, i32) {
    %c0_i32 = arith.constant 0 : i32
    %c0_i32_0 = arith.constant 0 : i32
    return %arg0, %c0_i32 : i32, i32
  }
}

</mosaic_0001>

<llo_original>
// kernel: tpu_custom_call.1
$region0: #{tpu_custom_call.1}
  #allocation0 [shape = 'u32[]', space=smem, size = 0x4, offset = 0x4, fixed_abs, tag = 'smem constant byte address 0x4 - core index']
  #allocation1 [shape = 'u32[144,128]{1,0:T(1,128)}', space=vmem, size = 0x12000, scoped, tag = 'internal scratch']
  #allocation2 [shape = 'f32[128,32]{1,0:T(8,128)}', space=vmem, size = 0x10000, scoped, tag = 'scratch operand']
  #allocation3 [shape = 'f32[128,1]{1,0:T(8,128)}', space=vmem, size = 0x10000, scoped, tag = 'scratch operand']
  #allocation4 [shape = 'f32[1,1]{1,0:T(1,128)S(6)}', space=smem, size = 0x200, scoped, tag = 'scoped memory for tpu_custom_call.1']
  %s0 = inlined_call_operand.<no memory space> [shape: f32[1,1], index: 0, kind: input, shape index: {}]
  %s1 = inlined_call_operand.vmem [shape: bf16[128,128], index: 1, kind: input, shape index: {}]
  %s2 = inlined_call_operand.vmem [shape: f32[128,32], index: 2, kind: input, shape index: {}]
  %s3 = inlined_call_operand.vmem [shape: f32[128,32], index: 3, kind: input, shape index: {}]
  %s4 = inlined_call_operand.vmem [shape: f32[32,64], index: 4, kind: input, shape index: {}]
  %s5 = inlined_call_operand.vmem [shape: f32[1,64], index: 5, kind: input, shape index: {}]
  %s6 = inlined_call_operand.vmem [shape: f32[64,128], index: 6, kind: input, shape index: {}]
  %s7 = inlined_call_operand.vmem [shape: f32[1,128], index: 7, kind: input, shape index: {}]
  %s8 = inlined_call_operand.hbm [shape: f32[128,128], index: 8, kind: output, shape index: {}]
  %s9 = sld [smem:[#allocation0]]
  $region50: #{tpu_custom_call.1} parent=0
    _
  %s11 = ssub.s32 1, %s9
  %s12 = scalar_select 0, %s11, %s9
  %13 = sst [smem:[#allocation4]] %s0
  $region1: #{tpu_custom_call.1} parent=0
    #allocation5 [shape = 'u8[65536]{0}', space=vmem, size = 0x10000, scoped, tag = 'output window, operand 0, single buffered']
    #allocation6 [shape = 's32[1]{0}', space=sflag, size = 0x4, scoped, tag = 'scoped memory for tpu_custom_call.1']
    %14 = vsyncpa [#allocation6], 0
    // Predicated region
    $region2: #{tpu_custom_call.1} parent=1 // pred_check
      _
    $region3: #{tpu_custom_call.1} parent=1 // pred_check_branch
      %16 = sbr.rel (0) target = $region5
    $region4: #{tpu_custom_call.1} parent=1 // pred_region
      _
    $region5: #{tpu_custom_call.1} parent=1 // pred_fallthru
      _
    // Predicated region
    $region6: #{tpu_custom_call.1} parent=1 // pred_check
      _
    $region7: #{tpu_custom_call.1} parent=1 // pred_check_branch
      %18 = sbr.rel (0) target = $region9
    $region8: #{tpu_custom_call.1} parent=1 // pred_region
      _
    $region9: #{tpu_custom_call.1} parent=1 // pred_fallthru
      _
    // Predicated region
    $region10: #{tpu_custom_call.1} parent=1 // pred_check
      _
    $region11: #{tpu_custom_call.1} parent=1 // pred_check_branch
      %20 = sbr.rel (0) target = $region13
    $region12: #{tpu_custom_call.1} parent=1 // pred_region
      _
    $region13: #{tpu_custom_call.1} parent=1 // pred_fallthru
      _
    // Predicated region
    $region14: #{tpu_custom_call.1} parent=1 // pred_check
      _
    $region15: #{tpu_custom_call.1} parent=1 // pred_check_branch
      %22 = sbr.rel (0) target = $region17
    $region16: #{tpu_custom_call.1} parent=1 // pred_region
      _
    $region17: #{tpu_custom_call.1} parent=1 // pred_fallthru
      _
    // Predicated region
    $region18: #{tpu_custom_call.1} parent=1 // pred_check
      _
    $region19: #{tpu_custom_call.1} parent=1 // pred_check_branch
      %24 = sbr.rel (0) target = $region21
    $region20: #{tpu_custom_call.1} parent=1 // pred_region
      _
    $region21: #{tpu_custom_call.1} parent=1 // pred_fallthru
      _
    // Predicated region
    $region22: #{tpu_custom_call.1} parent=1 // pred_check
      _
    $region23: #{tpu_custom_call.1} parent=1 // pred_check_branch
      %26 = sbr.rel (0) target = $region25
    $region24: #{tpu_custom_call.1} parent=1 // pred_region
      _
    $region25: #{tpu_custom_call.1} parent=1 // pred_fallthru
      _
    // Predicated region
    $region26: #{tpu_custom_call.1} parent=1 // pred_check
      _
    $region27: #{tpu_custom_call.1} parent=1 // pred_check_branch
      %28 = sbr.rel (0) target = $region29
    $region28: #{tpu_custom_call.1} parent=1 // pred_region
      _
    $region29: #{tpu_custom_call.1} parent=1 // pred_fallthru
      _
    // Predicated region
    $region30: #{tpu_custom_call.1} parent=1 // pred_check
      _
    $region31: #{tpu_custom_call.1} parent=1 // pred_check_branch
      %30 = sbr.rel (0) target = $region33
    $region32: #{tpu_custom_call.1} parent=1 // pred_region
      _
    $region33: #{tpu_custom_call.1} parent=1 // pred_fallthru
      _
    %p31 = scmp.eq.s32.totalorder 0, 0
    // Predicated region
    $region34: #{tpu_custom_call.1} parent=1 // pred_check
      %p32 = pneg %p31
    $region35: #{tpu_custom_call.1} parent=1 // pred_check_branch
      %34 = sbr.rel (%p32) target = $region37
    $region36: #{tpu_custom_call.1} parent=1 // pred_region
      %vm35 = vcmask 261120
      %36 = vst.msk [vmem:[#allocation2] sm:$0xff] %vm35, 0.0
      %37 = vst.msk [vmem:[#allocation2 + $0x8] sm:$0xff] %vm35, 0.0
      %38 = vst.msk [vmem:[#allocation2 + $0x10] sm:$0xff] %vm35, 0.0
      %39 = vst.msk [vmem:[#allocation2 + $0x18] sm:$0xff] %vm35, 0.0
      %40 = vst.msk [vmem:[#allocation2 + $0x20] sm:$0xff] %vm35, 0.0
      %41 = vst.msk [vmem:[#allocation2 + $0x28] sm:$0xff] %vm35, 0.0
      %42 = vst.msk [vmem:[#allocation2 + $0x30] sm:$0xff] %vm35, 0.0
      %43 = vst.msk [vmem:[#allocation2 + $0x38] sm:$0xff] %vm35, 0.0
      %44 = vst.msk [vmem:[#allocation2 + $0x40] sm:$0xff] %vm35, 0.0
      %45 = vst.msk [vmem:[#allocation2 + $0x48] sm:$0xff] %vm35, 0.0
      %46 = vst.msk [vmem:[#allocation2 + $0x50] sm:$0xff] %vm35, 0.0
      %47 = vst.msk [vmem:[#allocation2 + $0x58] sm:$0xff] %vm35, 0.0
      %48 = vst.msk [vmem:[#allocation2 + $0x60] sm:$0xff] %vm35, 0.0
      %49 = vst.msk [vmem:[#allocation2 + $0x68] sm:$0xff] %vm35, 0.0
      %50 = vst.msk [vmem:[#allocation2 + $0x70] sm:$0xff] %vm35, 0.0
      %51 = vst.msk [vmem:[#allocation2 + $0x78] sm:$0xff] %vm35, 0.0
      %vm52 = vcmask 7168
      %53 = vst.msk [vmem:[#allocation3] sm:$0xff] %vm52, 0.0
      %54 = vst.msk [vmem:[#allocation3 + $0x8] sm:$0xff] %vm52, 0.0
      %55 = vst.msk [vmem:[#allocation3 + $0x10] sm:$0xff] %vm52, 0.0
      %56 = vst.msk [vmem:[#allocation3 + $0x18] sm:$0xff] %vm52, 0.0
      %57 = vst.msk [vmem:[#allocation3 + $0x20] sm:$0xff] %vm52, 0.0
      %58 = vst.msk [vmem:[#allocation3 + $0x28] sm:$0xff] %vm52, 0.0
      %59 = vst.msk [vmem:[#allocation3 + $0x30] sm:$0xff] %vm52, 0.0
      %60 = vst.msk [vmem:[#allocation3 + $0x38] sm:$0xff] %vm52, 0.0
      %61 = vst.msk [vmem:[#allocation3 + $0x40] sm:$0xff] %vm52, 0.0
      %62 = vst.msk [vmem:[#allocation3 + $0x48] sm:$0xff] %vm52, 0.0
      %63 = vst.msk [vmem:[#allocation3 + $0x50] sm:$0xff] %vm52, 0.0
      %64 = vst.msk [vmem:[#allocation3 + $0x58] sm:$0xff] %vm52, 0.0
      %65 = vst.msk [vmem:[#allocation3 + $0x60] sm:$0xff] %vm52, 0.0
      %66 = vst.msk [vmem:[#allocation3 + $0x68] sm:$0xff] %vm52, 0.0
      %67 = vst.msk [vmem:[#allocation3 + $0x70] sm:$0xff] %vm52, 0.0
      %68 = vst.msk [vmem:[#allocation3 + $0x78] sm:$0xff] %vm52, 0.0
    $region37: #{tpu_custom_call.1} parent=1 // pred_fallthru
      _
    %v69 = vld [vmem:[%s1] sm:$0xf]
    %v70 = vld [vmem:[%s1 + $0x4] sm:$0xf]
    %v71 = vld [vmem:[%s1 + $0x8] sm:$0xf]
    %v72 = vld [vmem:[%s1 + $0xc] sm:$0xf]
    %v73 = vld [vmem:[%s1 + $0x10] sm:$0xf]
    %v74 = vld [vmem:[%s1 + $0x14] sm:$0xf]
    %v75 = vld [vmem:[%s1 + $0x18] sm:$0xf]
    %v76 = vld [vmem:[%s1 + $0x1c] sm:$0xf]
    %v77 = vld [vmem:[%s1 + $0x20] sm:$0xf]
    %v78 = vld [vmem:[%s1 + $0x24] sm:$0xf]
    %v79 = vld [vmem:[%s1 + $0x28] sm:$0xf]
    %v80 = vld [vmem:[%s1 + $0x2c] sm:$0xf]
    %v81 = vld [vmem:[%s1 + $0x30] sm:$0xf]
    %v82 = vld [vmem:[%s1 + $0x34] sm:$0xf]
    %v83 = vld [vmem:[%s1 + $0x38] sm:$0xf]
    %v84 = vld [vmem:[%s1 + $0x3c] sm:$0xf]
    %v85 = vunpack.c.l.bf16 %v69
    %v86 = vunpack.c.l.bf16 %v70
    %v87 = vunpack.c.l.bf16 %v71
    %v88 = vunpack.c.l.bf16 %v72
    %v89 = vunpack.c.l.bf16 %v73
    %v90 = vunpack.c.l.bf16 %v74
    %v91 = vunpack.c.l.bf16 %v75
    %v92 = vunpack.c.l.bf16 %v76
    %v93 = vunpack.c.l.bf16 %v77
    %v94 = vunpack.c.l.bf16 %v78
    %v95 = vunpack.c.l.bf16 %v79
    %v96 = vunpack.c.l.bf16 %v80
    %v97 = vunpack.c.l.bf16 %v81
    %v98 = vunpack.c.l.bf16 %v82
    %v99 = vunpack.c.l.bf16 %v83
    %v100 = vunpack.c.l.bf16 %v84
    %v101 = vld [vmem:[#allocation2] sm:$0xff]
    %v102 = vld [vmem:[#allocation2 + $0x8] sm:$0xff]
    %v103 = vld [vmem:[#allocation2 + $0x10] sm:$0xff]
    %v104 = vld [vmem:[#allocation2 + $0x18] sm:$0xff]
    %v105 = vld [vmem:[#allocation2 + $0x20] sm:$0xff]
    %v106 = vld [vmem:[#allocation2 + $0x28] sm:$0xff]
    %v107 = vld [vmem:[#allocation2 + $0x30] sm:$0xff]
    %v108 = vld [vmem:[#allocation2 + $0x38] sm:$0xff]
    %v109 = vld [vmem:[#allocation2 + $0x40] sm:$0xff]
    %v110 = vld [vmem:[#allocation2 + $0x48] sm:$0xff]
    %v111 = vld [vmem:[#allocation2 + $0x50] sm:$0xff]
    %v112 = vld [vmem:[#allocation2 + $0x58] sm:$0xff]
    %v113 = vld [vmem:[#allocation2 + $0x60] sm:$0xff]
    %v114 = vld [vmem:[#allocation2 + $0x68] sm:$0xff]
    %v115 = vld [vmem:[#allocation2 + $0x70] sm:$0xff]
    %v116 = vld [vmem:[#allocation2 + $0x78] sm:$0xff]
    %v117 = vld [vmem:[%s2] sm:$0xff]
    %v118 = vld [vmem:[%s2 + $0x8] sm:$0xff]
    %v119 = vld [vmem:[%s2 + $0x10] sm:$0xff]
    %v120 = vld [vmem:[%s2 + $0x18] sm:$0xff]
    %v121 = vld [vmem:[%s2 + $0x20] sm:$0xff]
    %v122 = vld [vmem:[%s2 + $0x28] sm:$0xff]
    %v123 = vld [vmem:[%s2 + $0x30] sm:$0xff]
    %v124 = vld [vmem:[%s2 + $0x38] sm:$0xff]
    %v125 = vld [vmem:[%s2 + $0x40] sm:$0xff]
    %v126 = vld [vmem:[%s2 + $0x48] sm:$0xff]
    %v127 = vld [vmem:[%s2 + $0x50] sm:$0xff]
    %v128 = vld [vmem:[%s2 + $0x58] sm:$0xff]
    %v129 = vld [vmem:[%s2 + $0x60] sm:$0xff]
    %v130 = vld [vmem:[%s2 + $0x68] sm:$0xff]
    %v131 = vld [vmem:[%s2 + $0x70] sm:$0xff]
    %v132 = vld [vmem:[%s2 + $0x78] sm:$0xff]
    %133 = vmatprep.subr.mxu0 0.0
    %134 = vmatpush1.msra.mxu0 %v117
    %135 = vmatprep.subr.mxu0 0.0
    %136 = vmatpush1.msra.mxu0 %v118
    %137 = vmatprep.subr.mxu0 0.0
    %138 = vmatpush1.msra.mxu0 %v119
    %139 = vmatprep.subr.mxu0 0.0
    %140 = vmatpush1.msra.mxu0 %v120
    %141 = vmatprep.subr.mxu0 0.0
    %142 = vmatpush1.msra.mxu0 %v121
    %143 = vmatprep.subr.mxu0 0.0
    %144 = vmatpush1.msra.mxu0 %v122
    %145 = vmatprep.subr.mxu0 0.0
    %146 = vmatpush1.msra.mxu0 %v123
    %147 = vmatprep.subr.mxu0 0.0
    %148 = vmatpush1.msra.mxu0 %v124
    %149 = vmatprep.subr.mxu0 0.0
    %150 = vmatpush1.msra.mxu0 %v125
    %151 = vmatprep.subr.mxu0 0.0
    %152 = vmatpush1.msra.mxu0 %v126
    %153 = vmatprep.subr.mxu0 0.0
    %154 = vmatpush1.msra.mxu0 %v127
    %155 = vmatprep.subr.mxu0 0.0
    %156 = vmatpush1.msra.mxu0 %v128
    %157 = vmatprep.subr.mxu0 0.0
    %158 = vmatpush1.msra.mxu0 %v129
    %159 = vmatprep.subr.mxu0 0.0
    %160 = vmatpush1.msra.mxu0 %v130
    %161 = vmatprep.subr.mxu0 0.0
    %162 = vmatpush1.msra.mxu0 %v131
    %163 = vmatprep.subr.mxu0 0.0
    %164 = vmatpush1.msra.mxu0 %v132
    %165 = vmatprep.subr.mxu0 0.0
    %166 = vmatpush1.msra.mxu0 0.0
    %167 = vmatprep.subr.mxu0 0.0
    %168 = vmatpush1.msra.mxu0 0.0
    %169 = vmatprep.subr.mxu0 0.0
    %170 = vmatpush1.msra.mxu0 0.0
    %171 = vmatprep.subr.mxu0 0.0
    %172 = vmatpush1.msra.mxu0 0.0
    %173 = vmatprep.subr.mxu0 0.0
    %174 = vmatpush1.msra.mxu0 0.0
    %175 = vmatprep.subr.mxu0 0.0
    %176 = vmatpush1.msra.mxu0 0.0
    %177 = vmatprep.subr.mxu0 0.0
    %178 = vmatpush1.msra.mxu0 0.0
    %179 = vmatprep.subr.mxu0 0.0
    %180 = vmatpush1.msra.mxu0 0.0
    %181 = vmatprep.subr.mxu0 0.0
    %182 = vmatpush1.msra.mxu0 0.0
    %183 = vmatprep.subr.mxu0 0.0
    %184 = vmatpush1.msra.mxu0 0.0
    %185 = vmatprep.subr.mxu0 0.0
    %186 = vmatpush1.msra.mxu0 0.0
    %187 = vmatprep.subr.mxu0 0.0
    %188 = vmatpush1.msra.mxu0 0.0
    %189 = vmatprep.subr.mxu0 0.0
    %190 = vmatpush1.msra.mxu0 0.0
    %191 = vmatprep.subr.mxu0 0.0
    %192 = vmatpush1.msra.mxu0 0.0
    %193 = vmatprep.subr.mxu0 0.0
    %194 = vmatpush1.msra.mxu0 0.0
    %195 = vmatprep.subr.mxu0 0.0
    %196 = vmatpush1.msra.mxu0 0.0
    %197 = vmatprep.mubr.f32.mxu0 0.0
    %198 = vmatmul.mubr.f32.gmra.mrb[0].mxu0 %v85
    %v199 = vpop.f32.mrb[0].mxu0
    %v200 = vadd.f32 0.0, %v199
    %v201 = vpop.f32.mrb[0].mxu0
    %202 = vmatprep.mubr.f32.mxu0 0.0
    %203 = vmatmul.mubr.f32.gmra.mrb[0].mxu0 %v86
    %v204 = vpop.f32.mrb[0].mxu0
    %v205 = vadd.f32 0.0, %v204
    %v206 = vpop.f32.mrb[0].mxu0
    %207 = vmatprep.mubr.f32.mxu0 0.0
    %208 = vmatmul.mubr.f32.gmra.mrb[0].mxu0 %v87
    %v209 = vpop.f32.mrb[0].mxu0
    %v210 = vadd.f32 0.0, %v209
    %v211 = vpop.f32.mrb[0].mxu0
    %212 = vmatprep.mubr.f32.mxu0 0.0
    %213 = vmatmul.mubr.f32.gmra.mrb[0].mxu0 %v88
    %v214 = vpop.f32.mrb[0].mxu0
    %v215 = vadd.f32 0.0, %v214
    %v216 = vpop.f32.mrb[0].mxu0
    %217 = vmatprep.mubr.f32.mxu0 0.0
    %218 = vmatmul.mubr.f32.gmra.mrb[0].mxu0 %v89
    %v219 = vpop.f32.mrb[0].mxu0
    %v220 = vadd.f32 0.0, %v219
    %v221 = vpop.f32.mrb[0].mxu0
    %222 = vmatprep.mubr.f32.mxu0 0.0
    %223 = vmatmul.mubr.f32.gmra.mrb[0].mxu0 %v90
    %v224 = vpop.f32.mrb[0].mxu0
    %v225 = vadd.f32 0.0, %v224
    %v226 = vpop.f32.mrb[0].mxu0
    %227 = vmatprep.mubr.f32.mxu0 0.0
    %228 = vmatmul.mubr.f32.gmra.mrb[0].mxu0 %v91
    %v229 = vpop.f32.mrb[0].mxu0
    %v230 = vadd.f32 0.0, %v229
    %v231 = vpop.f32.mrb[0].mxu0
    %232 = vmatprep.mubr.f32.mxu0 0.0
    %233 = vmatmul.mubr.f32.gmra.mrb[0].mxu0 %v92
    %v234 = vpop.f32.mrb[0].mxu0
    %v235 = vadd.f32 0.0, %v234
    %v236 = vpop.f32.mrb[0].mxu0
    %237 = vmatprep.mubr.f32.mxu0 0.0
    %238 = vmatmul.mubr.f32.gmra.mrb[0].mxu0 %v93
    %v239 = vpop.f32.mrb[0].mxu0
    %v240 = vadd.f32 0.0, %v239
    %v241 = vpop.f32.mrb[0].mxu0
    %242 = vmatprep.mubr.f32.mxu0 0.0
    %243 = vmatmul.mubr.f32.gmra.mrb[0].mxu0 %v94
    %v244 = vpop.f32.mrb[0].mxu0
    %v245 = vadd.f32 0.0, %v244
    %v246 = vpop.f32.mrb[0].mxu0
    %247 = vmatprep.mubr.f32.mxu0 0.0
    %248 = vmatmul.mubr.f32.gmra.mrb[0].mxu0 %v95
    %v249 = vpop.f32.mrb[0].mxu0
    %v250 = vadd.f32 0.0, %v249
    %v251 = vpop.f32.mrb[0].mxu0
    %252 = vmatprep.mubr.f32.mxu0 0.0
    %253 = vmatmul.mubr.f32.gmra.mrb[0].mxu0 %v96
    %v254 = vpop.f32.mrb[0].mxu0
    %v255 = vadd.f32 0.0, %v254
    %v256 = vpop.f32.mrb[0].mxu0
    %257 = vmatprep.mubr.f32.mxu0 0.0
    %258 = vmatmul.mubr.f32.gmra.mrb[0].mxu0 %v97
    %v259 = vpop.f32.mrb[0].mxu0
    %v260 = vadd.f32 0.0, %v259
    %v261 = vpop.f32.mrb[0].mxu0
    %262 = vmatprep.mubr.f32.mxu0 0.0
    %263 = vmatmul.mubr.f32.gmra.mrb[0].mxu0 %v98
    %v264 = vpop.f32.mrb[0].mxu0
    %v265 = vadd.f32 0.0, %v264
    %v266 = vpop.f32.mrb[0].mxu0
    %267 = vmatprep.mubr.f32.mxu0 0.0
    %268 = vmatmul.mubr.f32.gmra.mrb[0].mxu0 %v99
    %v269 = vpop.f32.mrb[0].mxu0
    %v270 = vadd.f32 0.0, %v269
    %v271 = vpop.f32.mrb[0].mxu0
    %272 = vmatprep.mubr.f32.mxu0 0.0
    %273 = vmatmul.mubr.f32.gmra.mrb[0].mxu0 %v100
    %v274 = vpop.f32.mrb[0].mxu0
    %v275 = vadd.f32 0.0, %v274
    %v276 = vpop.f32.mrb[0].mxu0
    %277 = vdwg.mxu0
    %v278 = vadd.f32 %v101, %v200
    %v279 = vadd.f32 %v102, %v205
    %v280 = vadd.f32 %v103, %v210
    %v281 = vadd.f32 %v104, %v215
    %v282 = vadd.f32 %v105, %v220
    %v283 = vadd.f32 %v106, %v225
    %v284 = vadd.f32 %v107, %v230
    %v285 = vadd.f32 %v108, %v235
    %v286 = vadd.f32 %v109, %v240
    %v287 = vadd.f32 %v110, %v245
    %v288 = vadd.f32 %v111, %v250
    %v289 = vadd.f32 %v112, %v255
    %v290 = vadd.f32 %v113, %v260
    %v291 = vadd.f32 %v114, %v265
    %v292 = vadd.f32 %v115, %v270
    %v293 = vadd.f32 %v116, %v275
    %vm294 = vcmask 261120
    %295 = vst.msk [vmem:[#allocation2] sm:$0xff] %vm294, %v278
    %296 = vst.msk [vmem:[#allocation2 + $0x8] sm:$0xff] %vm294, %v279
    %297 = vst.msk [vmem:[#allocation2 + $0x10] sm:$0xff] %vm294, %v280
    %298 = vst.msk [vmem:[#allocation2 + $0x18] sm:$0xff] %vm294, %v281
    %299 = vst.msk [vmem:[#allocation2 + $0x20] sm:$0xff] %vm294, %v282
    %300 = vst.msk [vmem:[#allocation2 + $0x28] sm:$0xff] %vm294, %v283
    %301 = vst.msk [vmem:[#allocation2 + $0x30] sm:$0xff] %vm294, %v284
    %302 = vst.msk [vmem:[#allocation2 + $0x38] sm:$0xff] %vm294, %v285
    %303 = vst.msk [vmem:[#allocation2 + $0x40] sm:$0xff] %vm294, %v286
    %304 = vst.msk [vmem:[#allocation2 + $0x48] sm:$0xff] %vm294, %v287
    %305 = vst.msk [vmem:[#allocation2 + $0x50] sm:$0xff] %vm294, %v288
    %306 = vst.msk [vmem:[#allocation2 + $0x58] sm:$0xff] %vm294, %v289
    %307 = vst.msk [vmem:[#allocation2 + $0x60] sm:$0xff] %vm294, %v290
    %308 = vst.msk [vmem:[#allocation2 + $0x68] sm:$0xff] %vm294, %v291
    %309 = vst.msk [vmem:[#allocation2 + $0x70] sm:$0xff] %vm294, %v292
    %310 = vst.msk [vmem:[#allocation2 + $0x78] sm:$0xff] %vm294, %v293
    %v311 = vld [vmem:[#allocation3] sm:$0xff]
    %v312 = vld [vmem:[#allocation3 + $0x8] sm:$0xff]
    %v313 = vld [vmem:[#allocation3 + $0x10] sm:$0xff]
    %v314 = vld [vmem:[#allocation3 + $0x18] sm:$0xff]
    %v315 = vld [vmem:[#allocation3 + $0x20] sm:$0xff]
    %v316 = vld [vmem:[#allocation3 + $0x28] sm:$0xff]
    %v317 = vld [vmem:[#allocation3 + $0x30] sm:$0xff]
    %v318 = vld [vmem:[#allocation3 + $0x38] sm:$0xff]
    %v319 = vld [vmem:[#allocation3 + $0x40] sm:$0xff]
    %v320 = vld [vmem:[#allocation3 + $0x48] sm:$0xff]
    %v321 = vld [vmem:[#allocation3 + $0x50] sm:$0xff]
    %v322 = vld [vmem:[#allocation3 + $0x58] sm:$0xff]
    %v323 = vld [vmem:[#allocation3 + $0x60] sm:$0xff]
    %v324 = vld [vmem:[#allocation3 + $0x68] sm:$0xff]
    %v325 = vld [vmem:[#allocation3 + $0x70] sm:$0xff]
    %v326 = vld [vmem:[#allocation3 + $0x78] sm:$0xff]
    %327 = vadd.xlane.f32.xlu0 %v85
    %v328 = vpop.xlane.xlu0 %327
    %329 = vadd.xlane.f32.xlu0 %v86
    %v330 = vpop.xlane.xlu0 %329
    %331 = vadd.xlane.f32.xlu0 %v87
    %v332 = vpop.xlane.xlu0 %331
    %333 = vadd.xlane.f32.xlu0 %v88
    %v334 = vpop.xlane.xlu0 %333
    %335 = vadd.xlane.f32.xlu0 %v89
    %v336 = vpop.xlane.xlu0 %335
    %337 = vadd.xlane.f32.xlu0 %v90
    %v338 = vpop.xlane.xlu0 %337
    %339 = vadd.xlane.f32.xlu0 %v91
    %v340 = vpop.xlane.xlu0 %339
    %341 = vadd.xlane.f32.xlu0 %v92
    %v342 = vpop.xlane.xlu0 %341
    %343 = vadd.xlane.f32.xlu0 %v93
    %v344 = vpop.xlane.xlu0 %343
    %345 = vadd.xlane.f32.xlu0 %v94
    %v346 = vpop.xlane.xlu0 %345
    %347 = vadd.xlane.f32.xlu0 %v95
    %v348 = vpop.xlane.xlu0 %347
    %349 = vadd.xlane.f32.xlu0 %v96
    %v350 = vpop.xlane.xlu0 %349
    %351 = vadd.xlane.f32.xlu0 %v97
    %v352 = vpop.xlane.xlu0 %351
    %353 = vadd.xlane.f32.xlu0 %v98
    %v354 = vpop.xlane.xlu0 %353
    %355 = vadd.xlane.f32.xlu0 %v99
    %v356 = vpop.xlane.xlu0 %355
    %357 = vadd.xlane.f32.xlu0 %v100
    %v358 = vpop.xlane.xlu0 %357
    %v359 = vadd.f32 %v311, %v328
    %v360 = vadd.f32 %v312, %v330
    %v361 = vadd.f32 %v313, %v332
    %v362 = vadd.f32 %v314, %v334
    %v363 = vadd.f32 %v315, %v336
    %v364 = vadd.f32 %v316, %v338
    %v365 = vadd.f32 %v317, %v340
    %v366 = vadd.f32 %v318, %v342
    %v367 = vadd.f32 %v319, %v344
    %v368 = vadd.f32 %v320, %v346
    %v369 = vadd.f32 %v321, %v348
    %v370 = vadd.f32 %v322, %v350
    %v371 = vadd.f32 %v323, %v352
    %v372 = vadd.f32 %v324, %v354
    %v373 = vadd.f32 %v325, %v356
    %v374 = vadd.f32 %v326, %v358
    %vm375 = vcmask 7168
    %376 = vst.msk [vmem:[#allocation3] sm:$0xff] %vm375, %v359
    %377 = vst.msk [vmem:[#allocation3 + $0x8] sm:$0xff] %vm375, %v360
    %378 = vst.msk [vmem:[#allocation3 + $0x10] sm:$0xff] %vm375, %v361
    %379 = vst.msk [vmem:[#allocation3 + $0x18] sm:$0xff] %vm375, %v362
    %380 = vst.msk [vmem:[#allocation3 + $0x20] sm:$0xff] %vm375, %v363
    %381 = vst.msk [vmem:[#allocation3 + $0x28] sm:$0xff] %vm375, %v364
    %382 = vst.msk [vmem:[#allocation3 + $0x30] sm:$0xff] %vm375, %v365
    %383 = vst.msk [vmem:[#allocation3 + $0x38] sm:$0xff] %vm375, %v366
    %384 = vst.msk [vmem:[#allocation3 + $0x40] sm:$0xff] %vm375, %v367
    %385 = vst.msk [vmem:[#allocation3 + $0x48] sm:$0xff] %vm375, %v368
    %386 = vst.msk [vmem:[#allocation3 + $0x50] sm:$0xff] %vm375, %v369
    %387 = vst.msk [vmem:[#allocation3 + $0x58] sm:$0xff] %vm375, %v370
    %388 = vst.msk [vmem:[#allocation3 + $0x60] sm:$0xff] %vm375, %v371
    %389 = vst.msk [vmem:[#allocation3 + $0x68] sm:$0xff] %vm375, %v372
    %390 = vst.msk [vmem:[#allocation3 + $0x70] sm:$0xff] %vm375, %v373
    %391 = vst.msk [vmem:[#allocation3 + $0x78] sm:$0xff] %vm375, %v374
    // Predicated region
    $region38: #{tpu_custom_call.1} parent=1 // pred_check
      %p392 = pneg %p31
    $region39: #{tpu_custom_call.1} parent=1 // pred_check_branch
      %394 = sbr.rel (%p392) target = $region41
    $region40: #{tpu_custom_call.1} parent=1 // pred_region
      %s395 = sld [smem:[#allocation4]]
      %v396 = vld [vmem:[#allocation3] sm:$0xff]
      %v397 = vld [vmem:[#allocation3 + $0x8] sm:$0xff]
      %v398 = vld [vmem:[#allocation3 + $0x10] sm:$0xff]
      %v399 = vld [vmem:[#allocation3 + $0x18] sm:$0xff]
      %v400 = vld [vmem:[#allocation3 + $0x20] sm:$0xff]
      %v401 = vld [vmem:[#allocation3 + $0x28] sm:$0xff]
      %v402 = vld [vmem:[#allocation3 + $0x30] sm:$0xff]
      %v403 = vld [vmem:[#allocation3 + $0x38] sm:$0xff]
      %v404 = vld [vmem:[#allocation3 + $0x40] sm:$0xff]
      %v405 = vld [vmem:[#allocation3 + $0x48] sm:$0xff]
      %v406 = vld [vmem:[#allocation3 + $0x50] sm:$0xff]
      %v407 = vld [vmem:[#allocation3 + $0x58] sm:$0xff]
      %v408 = vld [vmem:[#allocation3 + $0x60] sm:$0xff]
      %v409 = vld [vmem:[#allocation3 + $0x68] sm:$0xff]
      %v410 = vld [vmem:[#allocation3 + $0x70] sm:$0xff]
      %v411 = vld [vmem:[#allocation3 + $0x78] sm:$0xff]
      %vm412 = vcmp.gt.f32.partialorder %v396, 0.0
      %vm413 = vcmp.gt.f32.partialorder %v397, 0.0
      %vm414 = vcmp.gt.f32.partialorder %v398, 0.0
      %vm415 = vcmp.gt.f32.partialorder %v399, 0.0
      %vm416 = vcmp.gt.f32.partialorder %v400, 0.0
      %vm417 = vcmp.gt.f32.partialorder %v401, 0.0
      %vm418 = vcmp.gt.f32.partialorder %v402, 0.0
      %vm419 = vcmp.gt.f32.partialorder %v403, 0.0
      %vm420 = vcmp.gt.f32.partialorder %v404, 0.0
      %vm421 = vcmp.gt.f32.partialorder %v405, 0.0
      %vm422 = vcmp.gt.f32.partialorder %v406, 0.0
      %vm423 = vcmp.gt.f32.partialorder %v407, 0.0
      %vm424 = vcmp.gt.f32.partialorder %v408, 0.0
      %vm425 = vcmp.gt.f32.partialorder %v409, 0.0
      %vm426 = vcmp.gt.f32.partialorder %v410, 0.0
      %vm427 = vcmp.gt.f32.partialorder %v411, 0.0
      %v428 = vmax.f32 %v396, 1.0
      %v429 = vmax.f32 %v397, 1.0
      %v430 = vmax.f32 %v398, 1.0
      %v431 = vmax.f32 %v399, 1.0
      %v432 = vmax.f32 %v400, 1.0
      %v433 = vmax.f32 %v401, 1.0
      %v434 = vmax.f32 %v402, 1.0
      %v435 = vmax.f32 %v403, 1.0
      %v436 = vmax.f32 %v404, 1.0
      %v437 = vmax.f32 %v405, 1.0
      %v438 = vmax.f32 %v406, 1.0
      %v439 = vmax.f32 %v407, 1.0
      %v440 = vmax.f32 %v408, 1.0
      %v441 = vmax.f32 %v409, 1.0
      %v442 = vmax.f32 %v410, 1.0
      %v443 = vmax.f32 %v411, 1.0
      %v444 = vrcp.pop %v428
      %v445 = vmul.f32 1.0, %v444
      %v446 = vrcp.pop %v429
      %v447 = vmul.f32 1.0, %v446
      %v448 = vrcp.pop %v430
      %v449 = vmul.f32 1.0, %v448
      %v450 = vrcp.pop %v431
      %v451 = vmul.f32 1.0, %v450
      %v452 = vrcp.pop %v432
      %v453 = vmul.f32 1.0, %v452
      %v454 = vrcp.pop %v433
      %v455 = vmul.f32 1.0, %v454
      %v456 = vrcp.pop %v434
      %v457 = vmul.f32 1.0, %v456
      %v458 = vrcp.pop %v435
      %v459 = vmul.f32 1.0, %v458
      %v460 = vrcp.pop %v436
      %v461 = vmul.f32 1.0, %v460
      %v462 = vrcp.pop %v437
      %v463 = vmul.f32 1.0, %v462
      %v464 = vrcp.pop %v438
      %v465 = vmul.f32 1.0, %v464
      %v466 = vrcp.pop %v439
      %v467 = vmul.f32 1.0, %v466
      %v468 = vrcp.pop %v440
      %v469 = vmul.f32 1.0, %v468
      %v470 = vrcp.pop %v441
      %v471 = vmul.f32 1.0, %v470
      %v472 = vrcp.pop %v442
      %v473 = vmul.f32 1.0, %v472
      %v474 = vrcp.pop %v443
      %v475 = vmul.f32 1.0, %v474
      %v476 = vsel %vm412, %v445, 0.0
      %v477 = vsel %vm413, %v447, 0.0
      %v478 = vsel %vm414, %v449, 0.0
      %v479 = vsel %vm415, %v451, 0.0
      %v480 = vsel %vm416, %v453, 0.0
      %v481 = vsel %vm417, %v455, 0.0
      %v482 = vsel %vm418, %v457, 0.0
      %v483 = vsel %vm419, %v459, 0.0
      %v484 = vsel %vm420, %v461, 0.0
      %v485 = vsel %vm421, %v463, 0.0
      %v486 = vsel %vm422, %v465, 0.0
      %v487 = vsel %vm423, %v467, 0.0
      %v488 = vsel %vm424, %v469, 0.0
      %v489 = vsel %vm425, %v471, 0.0
      %v490 = vsel %vm426, %v473, 0.0
      %v491 = vsel %vm427, %v475, 0.0
      %v492 = vld [vmem:[#allocation2] sm:$0xff]
      %v493 = vld [vmem:[#allocation2 + $0x8] sm:$0xff]
      %v494 = vld [vmem:[#allocation2 + $0x10] sm:$0xff]
      %v495 = vld [vmem:[#allocation2 + $0x18] sm:$0xff]
      %v496 = vld [vmem:[#allocation2 + $0x20] sm:$0xff]
      %v497 = vld [vmem:[#allocation2 + $0x28] sm:$0xff]
      %v498 = vld [vmem:[#allocation2 + $0x30] sm:$0xff]
      %v499 = vld [vmem:[#allocation2 + $0x38] sm:$0xff]
      %v500 = vld [vmem:[#allocation2 + $0x40] sm:$0xff]
      %v501 = vld [vmem:[#allocation2 + $0x48] sm:$0xff]
      %v502 = vld [vmem:[#allocation2 + $0x50] sm:$0xff]
      %v503 = vld [vmem:[#allocation2 + $0x58] sm:$0xff]
      %v504 = vld [vmem:[#allocation2 + $0x60] sm:$0xff]
      %v505 = vld [vmem:[#allocation2 + $0x68] sm:$0xff]
      %v506 = vld [vmem:[#allocation2 + $0x70] sm:$0xff]
      %v507 = vld [vmem:[#allocation2 + $0x78] sm:$0xff]
      %509 = vset.pattern.permute.xlu0 0
      %510 = vperm.xlu0 %509, %v476
      %v511 = vpop.permute.xlu0 %510
      %514 = vset.pattern.permute.xlu0 0
      %515 = vperm.xlu0 %514, %v477
      %v516 = vpop.permute.xlu0 %515
      %519 = vset.pattern.permute.xlu0 0
      %520 = vperm.xlu0 %519, %v478
      %v521 = vpop.permute.xlu0 %520
      %524 = vset.pattern.permute.xlu0 0
      %525 = vperm.xlu0 %524, %v479
      %v526 = vpop.permute.xlu0 %525
      %529 = vset.pattern.permute.xlu0 0
      %530 = vperm.xlu0 %529, %v480
      %v531 = vpop.permute.xlu0 %530
      %534 = vset.pattern.permute.xlu0 0
      %535 = vperm.xlu0 %534, %v481
      %v536 = vpop.permute.xlu0 %535
      %539 = vset.pattern.permute.xlu0 0
      %540 = vperm.xlu0 %539, %v482
      %v541 = vpop.permute.xlu0 %540
      %544 = vset.pattern.permute.xlu0 0
      %545 = vperm.xlu0 %544, %v483
      %v546 = vpop.permute.xlu0 %545
      %549 = vset.pattern.permute.xlu0 0
      %550 = vperm.xlu0 %549, %v484
      %v551 = vpop.permute.xlu0 %550
      %554 = vset.pattern.permute.xlu0 0
      %555 = vperm.xlu0 %554, %v485
      %v556 = vpop.permute.xlu0 %555
      %559 = vset.pattern.permute.xlu0 0
      %560 = vperm.xlu0 %559, %v486
      %v561 = vpop.permute.xlu0 %560
      %564 = vset.pattern.permute.xlu0 0
      %565 = vperm.xlu0 %564, %v487
      %v566 = vpop.permute.xlu0 %565
      %569 = vset.pattern.permute.xlu0 0
      %570 = vperm.xlu0 %569, %v488
      %v571 = vpop.permute.xlu0 %570
      %574 = vset.pattern.permute.xlu0 0
      %575 = vperm.xlu0 %574, %v489
      %v576 = vpop.permute.xlu0 %575
      %579 = vset.pattern.permute.xlu0 0
      %580 = vperm.xlu0 %579, %v490
      %v581 = vpop.permute.xlu0 %580
      %584 = vset.pattern.permute.xlu0 0
      %585 = vperm.xlu0 %584, %v491
      %v586 = vpop.permute.xlu0 %585
      %v588 = vmul.f32 %v492, %v511
      %v589 = vmul.f32 %v493, %v516
      %v590 = vmul.f32 %v494, %v521
      %v591 = vmul.f32 %v495, %v526
      %v592 = vmul.f32 %v496, %v531
      %v593 = vmul.f32 %v497, %v536
      %v594 = vmul.f32 %v498, %v541
      %v595 = vmul.f32 %v499, %v546
      %v596 = vmul.f32 %v500, %v551
      %v597 = vmul.f32 %v501, %v556
      %v598 = vmul.f32 %v502, %v561
      %v599 = vmul.f32 %v503, %v566
      %v600 = vmul.f32 %v504, %v571
      %v601 = vmul.f32 %v505, %v576
      %v602 = vmul.f32 %v506, %v581
      %v603 = vmul.f32 %v507, %v586
      %s604 = sadd.f32 %s395, 1.0
      %v605 = vld [vmem:[%s3] sm:$0xff]
      %v606 = vld [vmem:[%s3 + $0x8] sm:$0xff]
      %v607 = vld [vmem:[%s3 + $0x10] sm:$0xff]
      %v608 = vld [vmem:[%s3 + $0x18] sm:$0xff]
      %v609 = vld [vmem:[%s3 + $0x20] sm:$0xff]
      %v610 = vld [vmem:[%s3 + $0x28] sm:$0xff]
      %v611 = vld [vmem:[%s3 + $0x30] sm:$0xff]
      %v612 = vld [vmem:[%s3 + $0x38] sm:$0xff]
      %v613 = vld [vmem:[%s3 + $0x40] sm:$0xff]
      %v614 = vld [vmem:[%s3 + $0x48] sm:$0xff]
      %v615 = vld [vmem:[%s3 + $0x50] sm:$0xff]
      %v616 = vld [vmem:[%s3 + $0x58] sm:$0xff]
      %v617 = vld [vmem:[%s3 + $0x60] sm:$0xff]
      %v618 = vld [vmem:[%s3 + $0x68] sm:$0xff]
      %v619 = vld [vmem:[%s3 + $0x70] sm:$0xff]
      %v620 = vld [vmem:[%s3 + $0x78] sm:$0xff]
      %v621 = vstv %s604
      %v622 = vmul.f32 %v621, %v605
      %v623 = vmul.f32 %v621, %v606
      %v624 = vmul.f32 %v621, %v607
      %v625 = vmul.f32 %v621, %v608
      %v626 = vmul.f32 %v621, %v609
      %v627 = vmul.f32 %v621, %v610
      %v628 = vmul.f32 %v621, %v611
      %v629 = vmul.f32 %v621, %v612
      %v630 = vmul.f32 %v621, %v613
      %v631 = vmul.f32 %v621, %v614
      %v632 = vmul.f32 %v621, %v615
      %v633 = vmul.f32 %v621, %v616
      %v634 = vmul.f32 %v621, %v617
      %v635 = vmul.f32 %v621, %v618
      %v636 = vmul.f32 %v621, %v619
      %v637 = vmul.f32 %v621, %v620
      %v638 = vadd.f32 %v622, %v588
      %v639 = vadd.f32 %v623, %v589
      %v640 = vadd.f32 %v624, %v590
      %v641 = vadd.f32 %v625, %v591
      %v642 = vadd.f32 %v626, %v592
      %v643 = vadd.f32 %v627, %v593
      %v644 = vadd.f32 %v628, %v594
      %v645 = vadd.f32 %v629, %v595
      %v646 = vadd.f32 %v630, %v596
      %v647 = vadd.f32 %v631, %v597
      %v648 = vadd.f32 %v632, %v598
      %v649 = vadd.f32 %v633, %v599
      %v650 = vadd.f32 %v634, %v600
      %v651 = vadd.f32 %v635, %v601
      %v652 = vadd.f32 %v636, %v602
      %v653 = vadd.f32 %v637, %v603
      %v654 = vld [vmem:[%s4] sm:$0xff]
      %v655 = vld [vmem:[%s4 + $0x8] sm:$0xff]
      %v656 = vld [vmem:[%s4 + $0x10] sm:$0xff]
      %v657 = vld [vmem:[%s4 + $0x18] sm:$0xff]
      %v658 = vld [vmem:[%s5] sm:$0x1]
      %v660 = vlaneseq
      %v661 = vshrl.u32 %v660, 7
      %v662 = vsub.s32 0, %v661
      %v663 = vrot.slane %v658, %v662
      %v666 = vsel %vm294, %v638, 0
      %v669 = vsel %vm294, %v639, 0
      %v672 = vsel %vm294, %v640, 0
      %v675 = vsel %vm294, %v641, 0
      %v678 = vsel %vm294, %v642, 0
      %v681 = vsel %vm294, %v643, 0
      %v684 = vsel %vm294, %v644, 0
      %v687 = vsel %vm294, %v645, 0
      %v690 = vsel %vm294, %v646, 0
      %v693 = vsel %vm294, %v647, 0
      %v696 = vsel %vm294, %v648, 0
      %v699 = vsel %vm294, %v649, 0
      %v702 = vsel %vm294, %v650, 0
      %v705 = vsel %vm294, %v651, 0
      %v708 = vsel %vm294, %v652, 0
      %v711 = vsel %vm294, %v653, 0
      %713 = vmatprep.subr.mxu0 0.0
      %714 = vmatpush1.msra.mxu0 %v654
      %715 = vmatprep.subr.mxu0 0.0
      %716 = vmatpush1.msra.mxu0 %v655
      %717 = vmatprep.subr.mxu0 0.0
      %718 = vmatpush1.msra.mxu0 %v656
      %719 = vmatprep.subr.mxu0 0.0
      %720 = vmatpush1.msra.mxu0 %v657
      %721 = vmatprep.subr.mxu0 0.0
      %722 = vmatpush1.msra.mxu0 0.0
      %723 = vmatprep.subr.mxu0 0.0
      %724 = vmatpush1.msra.mxu0 0.0
      %725 = vmatprep.subr.mxu0 0.0
      %726 = vmatpush1.msra.mxu0 0.0
      %727 = vmatprep.subr.mxu0 0.0
      %728 = vmatpush1.msra.mxu0 0.0
      %729 = vmatprep.subr.mxu0 0.0
      %730 = vmatpush1.msra.mxu0 0.0
      %731 = vmatprep.subr.mxu0 0.0
      %732 = vmatpush1.msra.mxu0 0.0
      %733 = vmatprep.subr.mxu0 0.0
      %734 = vmatpush1.msra.mxu0 0.0
      %735 = vmatprep.subr.mxu0 0.0
      %736 = vmatpush1.msra.mxu0 0.0
      %737 = vmatprep.subr.mxu0 0.0
      %738 = vmatpush1.msra.mxu0 0.0
      %739 = vmatprep.subr.mxu0 0.0
      %740 = vmatpush1.msra.mxu0 0.0
      %741 = vmatprep.subr.mxu0 0.0
      %742 = vmatpush1.msra.mxu0 0.0
      %743 = vmatprep.subr.mxu0 0.0
      %744 = vmatpush1.msra.mxu0 0.0
      %745 = vmatprep.subr.mxu0 0.0
      %746 = vmatpush1.msra.mxu0 0.0
      %747 = vmatprep.subr.mxu0 0.0
      %748 = vmatpush1.msra.mxu0 0.0
      %749 = vmatprep.subr.mxu0 0.0
      %750 = vmatpush1.msra.mxu0 0.0
      %751 = vmatprep.subr.mxu0 0.0
      %752 = vmatpush1.msra.mxu0 0.0
      %753 = vmatprep.subr.mxu0 0.0
      %754 = vmatpush1.msra.mxu0 0.0
      %755 = vmatprep.subr.mxu0 0.0
      %756 = vmatpush1.msra.mxu0 0.0
      %757 = vmatprep.subr.mxu0 0.0
      %758 = vmatpush1.msra.mxu0 0.0
      %759 = vmatprep.subr.mxu0 0.0
      %760 = vmatpush1.msra.mxu0 0.0
      %761 = vmatprep.subr.mxu0 0.0
      %762 = vmatpush1.msra.mxu0 0.0
      %763 = vmatprep.subr.mxu0 0.0
      %764 = vmatpush1.msra.mxu0 0.0
      %765 = vmatprep.subr.mxu0 0.0
      %766 = vmatpush1.msra.mxu0 0.0
      %767 = vmatprep.subr.mxu0 0.0
      %768 = vmatpush1.msra.mxu0 0.0
      %769 = vmatprep.subr.mxu0 0.0
      %770 = vmatpush1.msra.mxu0 0.0
      %771 = vmatprep.subr.mxu0 0.0
      %772 = vmatpush1.msra.mxu0 0.0
      %773 = vmatprep.subr.mxu0 0.0
      %774 = vmatpush1.msra.mxu0 0.0
      %775 = vmatprep.subr.mxu0 0.0
      %776 = vmatpush1.msra.mxu0 0.0
      %777 = vmatprep.mubr.f32.mxu0 0.0
      %778 = vmatmul.mubr.f32.gmra.mrb[0].mxu0 %v666
      %v779 = vpop.f32.mrb[0].mxu0
      %v780 = vadd.f32 %v663, %v779
      %v781 = vpop.f32.mrb[0].mxu0
      %782 = vmatprep.mubr.f32.mxu0 0.0
      %783 = vmatmul.mubr.f32.gmra.mrb[0].mxu0 %v669
      %v784 = vpop.f32.mrb[0].mxu0
      %v785 = vadd.f32 %v663, %v784
      %v786 = vpop.f32.mrb[0].mxu0
      %787 = vmatprep.mubr.f32.mxu0 0.0
      %788 = vmatmul.mubr.f32.gmra.mrb[0].mxu0 %v672
      %v789 = vpop.f32.mrb[0].mxu0
      %v790 = vadd.f32 %v663, %v789
      %v791 = vpop.f32.mrb[0].mxu0
      %792 = vmatprep.mubr.f32.mxu0 0.0
      %793 = vmatmul.mubr.f32.gmra.mrb[0].mxu0 %v675
      %v794 = vpop.f32.mrb[0].mxu0
      %v795 = vadd.f32 %v663, %v794
      %v796 = vpop.f32.mrb[0].mxu0
      %797 = vmatprep.mubr.f32.mxu0 0.0
      %798 = vmatmul.mubr.f32.gmra.mrb[0].mxu0 %v678
      %v799 = vpop.f32.mrb[0].mxu0
      %v800 = vadd.f32 %v663, %v799
      %v801 = vpop.f32.mrb[0].mxu0
      %802 = vmatprep.mubr.f32.mxu0 0.0
      %803 = vmatmul.mubr.f32.gmra.mrb[0].mxu0 %v681
      %v804 = vpop.f32.mrb[0].mxu0
      %v805 = vadd.f32 %v663, %v804
      %v806 = vpop.f32.mrb[0].mxu0
      %807 = vmatprep.mubr.f32.mxu0 0.0
      %808 = vmatmul.mubr.f32.gmra.mrb[0].mxu0 %v684
      %v809 = vpop.f32.mrb[0].mxu0
      %v810 = vadd.f32 %v663, %v809
      %v811 = vpop.f32.mrb[0].mxu0
      %812 = vmatprep.mubr.f32.mxu0 0.0
      %813 = vmatmul.mubr.f32.gmra.mrb[0].mxu0 %v687
      %v814 = vpop.f32.mrb[0].mxu0
      %v815 = vadd.f32 %v663, %v814
      %v816 = vpop.f32.mrb[0].mxu0
      %817 = vmatprep.mubr.f32.mxu0 0.0
      %818 = vmatmul.mubr.f32.gmra.mrb[0].mxu0 %v690
      %v819 = vpop.f32.mrb[0].mxu0
      %v820 = vadd.f32 %v663, %v819
      %v821 = vpop.f32.mrb[0].mxu0
      %822 = vmatprep.mubr.f32.mxu0 0.0
      %823 = vmatmul.mubr.f32.gmra.mrb[0].mxu0 %v693
      %v824 = vpop.f32.mrb[0].mxu0
      %v825 = vadd.f32 %v663, %v824
      %v826 = vpop.f32.mrb[0].mxu0
      %827 = vmatprep.mubr.f32.mxu0 0.0
      %828 = vmatmul.mubr.f32.gmra.mrb[0].mxu0 %v696
      %v829 = vpop.f32.mrb[0].mxu0
      %v830 = vadd.f32 %v663, %v829
      %v831 = vpop.f32.mrb[0].mxu0
      %832 = vmatprep.mubr.f32.mxu0 0.0
      %833 = vmatmul.mubr.f32.gmra.mrb[0].mxu0 %v699
      %v834 = vpop.f32.mrb[0].mxu0
      %v835 = vadd.f32 %v663, %v834
      %v836 = vpop.f32.mrb[0].mxu0
      %837 = vmatprep.mubr.f32.mxu0 0.0
      %838 = vmatmul.mubr.f32.gmra.mrb[0].mxu0 %v702
      %v839 = vpop.f32.mrb[0].mxu0
      %v840 = vadd.f32 %v663, %v839
      %v841 = vpop.f32.mrb[0].mxu0
      %842 = vmatprep.mubr.f32.mxu0 0.0
      %843 = vmatmul.mubr.f32.gmra.mrb[0].mxu0 %v705
      %v844 = vpop.f32.mrb[0].mxu0
      %v845 = vadd.f32 %v663, %v844
      %v846 = vpop.f32.mrb[0].mxu0
      %847 = vmatprep.mubr.f32.mxu0 0.0
      %848 = vmatmul.mubr.f32.gmra.mrb[0].mxu0 %v708
      %v849 = vpop.f32.mrb[0].mxu0
      %v850 = vadd.f32 %v663, %v849
      %v851 = vpop.f32.mrb[0].mxu0
      %852 = vmatprep.mubr.f32.mxu0 0.0
      %853 = vmatmul.mubr.f32.gmra.mrb[0].mxu0 %v711
      %v854 = vpop.f32.mrb[0].mxu0
      %v855 = vadd.f32 %v663, %v854
      %v856 = vpop.f32.mrb[0].mxu0
      %857 = vdwg.mxu0
      %v858 = vmax.f32 %v780, 0.0
      %v859 = vmax.f32 %v785, 0.0
      %v860 = vmax.f32 %v790, 0.0
      %v861 = vmax.f32 %v795, 0.0
      %v862 = vmax.f32 %v800, 0.0
      %v863 = vmax.f32 %v805, 0.0
      %v864 = vmax.f32 %v810, 0.0
      %v865 = vmax.f32 %v815, 0.0
      %v866 = vmax.f32 %v820, 0.0
      %v867 = vmax.f32 %v825, 0.0
      %v868 = vmax.f32 %v830, 0.0
      %v869 = vmax.f32 %v835, 0.0
      %v870 = vmax.f32 %v840, 0.0
      %v871 = vmax.f32 %v845, 0.0
      %v872 = vmax.f32 %v850, 0.0
      %v873 = vmax.f32 %v855, 0.0
      %v874 = vld [vmem:[%s6] sm:$0xff]
      %v875 = vld [vmem:[%s6 + $0x8] sm:$0xff]
      %v876 = vld [vmem:[%s6 + $0x10] sm:$0xff]
      %v877 = vld [vmem:[%s6 + $0x18] sm:$0xff]
      %v878 = vld [vmem:[%s6 + $0x20] sm:$0xff]
      %v879 = vld [vmem:[%s6 + $0x28] sm:$0xff]
      %v880 = vld [vmem:[%s6 + $0x30] sm:$0xff]
      %v881 = vld [vmem:[%s6 + $0x38] sm:$0xff]
      %v882 = vld [vmem:[%s7] sm:$0x1]
      %v884 = vlaneseq
      %v885 = vshrl.u32 %v884, 7
      %v886 = vsub.s32 0, %v885
      %v887 = vrot.slane %v882, %v886
      %vm889 = vcmask 523264
      %v891 = vsel %vm889, %v858, 0
      %v894 = vsel %vm889, %v859, 0
      %v897 = vsel %vm889, %v860, 0
      %v900 = vsel %vm889, %v861, 0
      %v903 = vsel %vm889, %v862, 0
      %v906 = vsel %vm889, %v863, 0
      %v909 = vsel %vm889, %v864, 0
      %v912 = vsel %vm889, %v865, 0
      %v915 = vsel %vm889, %v866, 0
      %v918 = vsel %vm889, %v867, 0
      %v921 = vsel %vm889, %v868, 0
      %v924 = vsel %vm889, %v869, 0
      %v927 = vsel %vm889, %v870, 0
      %v930 = vsel %vm889, %v871, 0
      %v933 = vsel %vm889, %v872, 0
      %v936 = vsel %vm889, %v873, 0
      %938 = vmatprep.subr.mxu0 0.0
      %939 = vmatpush1.msra.mxu0 %v874
      %940 = vmatprep.subr.mxu0 0.0
      %941 = vmatpush1.msra.mxu0 %v875
      %942 = vmatprep.subr.mxu0 0.0
      %943 = vmatpush1.msra.mxu0 %v876
      %944 = vmatprep.subr.mxu0 0.0
      %945 = vmatpush1.msra.mxu0 %v877
      %946 = vmatprep.subr.mxu0 0.0
      %947 = vmatpush1.msra.mxu0 %v878
      %948 = vmatprep.subr.mxu0 0.0
      %949 = vmatpush1.msra.mxu0 %v879
      %950 = vmatprep.subr.mxu0 0.0
      %951 = vmatpush1.msra.mxu0 %v880
      %952 = vmatprep.subr.mxu0 0.0
      %953 = vmatpush1.msra.mxu0 %v881
      %954 = vmatprep.subr.mxu0 0.0
      %955 = vmatpush1.msra.mxu0 0.0
      %956 = vmatprep.subr.mxu0 0.0
      %957 = vmatpush1.msra.mxu0 0.0
      %958 = vmatprep.subr.mxu0 0.0
      %959 = vmatpush1.msra.mxu0 0.0
      %960 = vmatprep.subr.mxu0 0.0
      %961 = vmatpush1.msra.mxu0 0.0
      %962 = vmatprep.subr.mxu0 0.0
      %963 = vmatpush1.msra.mxu0 0.0
      %964 = vmatprep.subr.mxu0 0.0
      %965 = vmatpush1.msra.mxu0 0.0
      %966 = vmatprep.subr.mxu0 0.0
      %967 = vmatpush1.msra.mxu0 0.0
      %968 = vmatprep.subr.mxu0 0.0
      %969 = vmatpush1.msra.mxu0 0.0
      %970 = vmatprep.subr.mxu0 0.0
      %971 = vmatpush1.msra.mxu0 0.0
      %972 = vmatprep.subr.mxu0 0.0
      %973 = vmatpush1.msra.mxu0 0.0
      %974 = vmatprep.subr.mxu0 0.0
      %975 = vmatpush1.msra.mxu0 0.0
      %976 = vmatprep.subr.mxu0 0.0
      %977 = vmatpush1.msra.mxu0 0.0
      %978 = vmatprep.subr.mxu0 0.0
      %979 = vmatpush1.msra.mxu0 0.0
      %980 = vmatprep.subr.mxu0 0.0
      %981 = vmatpush1.msra.mxu0 0.0
      %982 = vmatprep.subr.mxu0 0.0
      %983 = vmatpush1.msra.mxu0 0.0
      %984 = vmatprep.subr.mxu0 0.0
      %985 = vmatpush1.msra.mxu0 0.0
      %986 = vmatprep.subr.mxu0 0.0
      %987 = vmatpush1.msra.mxu0 0.0
      %988 = vmatprep.subr.mxu0 0.0
      %989 = vmatpush1.msra.mxu0 0.0
      %990 = vmatprep.subr.mxu0 0.0
      %991 = vmatpush1.msra.mxu0 0.0
      %992 = vmatprep.subr.mxu0 0.0
      %993 = vmatpush1.msra.mxu0 0.0
      %994 = vmatprep.subr.mxu0 0.0
      %995 = vmatpush1.msra.mxu0 0.0
      %996 = vmatprep.subr.mxu0 0.0
      %997 = vmatpush1.msra.mxu0 0.0
      %998 = vmatprep.subr.mxu0 0.0
      %999 = vmatpush1.msra.mxu0 0.0
      %1000 = vmatprep.subr.mxu0 0.0
      %1001 = vmatpush1.msra.mxu0 0.0
      %1002 = vmatprep.mubr.f32.mxu0 0.0
      %1003 = vmatmul.mubr.f32.gmra.mrb[0].mxu0 %v891
      %v1004 = vpop.f32.mrb[0].mxu0
      %v1005 = vadd.f32 %v887, %v1004
      %v1006 = vpop.f32.mrb[0].mxu0
      %1007 = vmatprep.mubr.f32.mxu0 0.0
      %1008 = vmatmul.mubr.f32.gmra.mrb[0].mxu0 %v894
      %v1009 = vpop.f32.mrb[0].mxu0
      %v1010 = vadd.f32 %v887, %v1009
      %v1011 = vpop.f32.mrb[0].mxu0
      %1012 = vmatprep.mubr.f32.mxu0 0.0
      %1013 = vmatmul.mubr.f32.gmra.mrb[0].mxu0 %v897
      %v1014 = vpop.f32.mrb[0].mxu0
      %v1015 = vadd.f32 %v887, %v1014
      %v1016 = vpop.f32.mrb[0].mxu0
      %1017 = vmatprep.mubr.f32.mxu0 0.0
      %1018 = vmatmul.mubr.f32.gmra.mrb[0].mxu0 %v900
      %v1019 = vpop.f32.mrb[0].mxu0
      %v1020 = vadd.f32 %v887, %v1019
      %v1021 = vpop.f32.mrb[0].mxu0
      %1022 = vmatprep.mubr.f32.mxu0 0.0
      %1023 = vmatmul.mubr.f32.gmra.mrb[0].mxu0 %v903
      %v1024 = vpop.f32.mrb[0].mxu0
      %v1025 = vadd.f32 %v887, %v1024
      %v1026 = vpop.f32.mrb[0].mxu0
      %1027 = vmatprep.mubr.f32.mxu0 0.0
      %1028 = vmatmul.mubr.f32.gmra.mrb[0].mxu0 %v906
      %v1029 = vpop.f32.mrb[0].mxu0
      %v1030 = vadd.f32 %v887, %v1029
      %v1031 = vpop.f32.mrb[0].mxu0
      %1032 = vmatprep.mubr.f32.mxu0 0.0
      %1033 = vmatmul.mubr.f32.gmra.mrb[0].mxu0 %v909
      %v1034 = vpop.f32.mrb[0].mxu0
      %v1035 = vadd.f32 %v887, %v1034
      %v1036 = vpop.f32.mrb[0].mxu0
      %1037 = vmatprep.mubr.f32.mxu0 0.0
      %1038 = vmatmul.mubr.f32.gmra.mrb[0].mxu0 %v912
      %v1039 = vpop.f32.mrb[0].mxu0
      %v1040 = vadd.f32 %v887, %v1039
      %v1041 = vpop.f32.mrb[0].mxu0
      %1042 = vmatprep.mubr.f32.mxu0 0.0
      %1043 = vmatmul.mubr.f32.gmra.mrb[0].mxu0 %v915
      %v1044 = vpop.f32.mrb[0].mxu0
      %v1045 = vadd.f32 %v887, %v1044
      %v1046 = vpop.f32.mrb[0].mxu0
      %1047 = vmatprep.mubr.f32.mxu0 0.0
      %1048 = vmatmul.mubr.f32.gmra.mrb[0].mxu0 %v918
      %v1049 = vpop.f32.mrb[0].mxu0
      %v1050 = vadd.f32 %v887, %v1049
      %v1051 = vpop.f32.mrb[0].mxu0
      %1052 = vmatprep.mubr.f32.mxu0 0.0
      %1053 = vmatmul.mubr.f32.gmra.mrb[0].mxu0 %v921
      %v1054 = vpop.f32.mrb[0].mxu0
      %v1055 = vadd.f32 %v887, %v1054
      %v1056 = vpop.f32.mrb[0].mxu0
      %1057 = vmatprep.mubr.f32.mxu0 0.0
      %1058 = vmatmul.mubr.f32.gmra.mrb[0].mxu0 %v924
      %v1059 = vpop.f32.mrb[0].mxu0
      %v1060 = vadd.f32 %v887, %v1059
      %v1061 = vpop.f32.mrb[0].mxu0
      %1062 = vmatprep.mubr.f32.mxu0 0.0
      %1063 = vmatmul.mubr.f32.gmra.mrb[0].mxu0 %v927
      %v1064 = vpop.f32.mrb[0].mxu0
      %v1065 = vadd.f32 %v887, %v1064
      %v1066 = vpop.f32.mrb[0].mxu0
      %1067 = vmatprep.mubr.f32.mxu0 0.0
      %1068 = vmatmul.mubr.f32.gmra.mrb[0].mxu0 %v930
      %v1069 = vpop.f32.mrb[0].mxu0
      %v1070 = vadd.f32 %v887, %v1069
      %v1071 = vpop.f32.mrb[0].mxu0
      %1072 = vmatprep.mubr.f32.mxu0 0.0
      %1073 = vmatmul.mubr.f32.gmra.mrb[0].mxu0 %v933
      %v1074 = vpop.f32.mrb[0].mxu0
      %v1075 = vadd.f32 %v887, %v1074
      %v1076 = vpop.f32.mrb[0].mxu0
      %1077 = vmatprep.mubr.f32.mxu0 0.0
      %1078 = vmatmul.mubr.f32.gmra.mrb[0].mxu0 %v936
      %v1079 = vpop.f32.mrb[0].mxu0
      %v1080 = vadd.f32 %v887, %v1079
      %v1081 = vpop.f32.mrb[0].mxu0
      %1082 = vdwg.mxu0
      %v1083 = vmax.f32 %v1005, 0.0
      %v1084 = vmax.f32 %v1010, 0.0
      %v1085 = vmax.f32 %v1015, 0.0
      %v1086 = vmax.f32 %v1020, 0.0
      %v1087 = vmax.f32 %v1025, 0.0
      %v1088 = vmax.f32 %v1030, 0.0
      %v1089 = vmax.f32 %v1035, 0.0
      %v1090 = vmax.f32 %v1040, 0.0
      %v1091 = vmax.f32 %v1045, 0.0
      %v1092 = vmax.f32 %v1050, 0.0
      %v1093 = vmax.f32 %v1055, 0.0
      %v1094 = vmax.f32 %v1060, 0.0
      %v1095 = vmax.f32 %v1065, 0.0
      %v1096 = vmax.f32 %v1070, 0.0
      %v1097 = vmax.f32 %v1075, 0.0
      %v1098 = vmax.f32 %v1080, 0.0
      %1099 = vst [vmem:[#allocation5] sm:$0xff] %v1083
      %1100 = vst [vmem:[#allocation5 + $0x8] sm:$0xff] %v1084
      %1101 = vst [vmem:[#allocation5 + $0x10] sm:$0xff] %v1085
      %1102 = vst [vmem:[#allocation5 + $0x18] sm:$0xff] %v1086
      %1103 = vst [vmem:[#allocation5 + $0x20] sm:$0xff] %v1087
      %1104 = vst [vmem:[#allocation5 + $0x28] sm:$0xff] %v1088
      %1105 = vst [vmem:[#allocation5 + $0x30] sm:$0xff] %v1089
      %1106 = vst [vmem:[#allocation5 + $0x38] sm:$0xff] %v1090
      %1107 = vst [vmem:[#allocation5 + $0x40] sm:$0xff] %v1091
      %1108 = vst [vmem:[#allocation5 + $0x48] sm:$0xff] %v1092
      %1109 = vst [vmem:[#allocation5 + $0x50] sm:$0xff] %v1093
      %1110 = vst [vmem:[#allocation5 + $0x58] sm:$0xff] %v1094
      %1111 = vst [vmem:[#allocation5 + $0x60] sm:$0xff] %v1095
      %1112 = vst [vmem:[#allocation5 + $0x68] sm:$0xff] %v1096
      %1113 = vst [vmem:[#allocation5 + $0x70] sm:$0xff] %v1097
      %1114 = vst [vmem:[#allocation5 + $0x78] sm:$0xff] %v1098
    $region41: #{tpu_custom_call.1} parent=1 // pred_fallthru
      _
    // Predicated region
    $region42: #{tpu_custom_call.1} parent=1 // pred_check
      _
    $region43: #{tpu_custom_call.1} parent=1 // pred_check_branch
      %1116 = sbr.rel (0) target = $region45
    $region44: #{tpu_custom_call.1} parent=1 // pred_region
      %s1118 = ssub.s32 2048, 2048
      %1119 = vsyncadd [#allocation6], %s1118
      %s1120 = sshll.u32 [#allocation5], 4
      %s1121 = int_to_ptr.vmem [resolvable:$true] %s1120
      %1126 = dma.vmem_to_hbm [thread:$0]  %s1121, 2048, %s8, [#allocation6], 128, 128, 8
    $region45: #{tpu_custom_call.1} parent=1 // pred_fallthru
      _
    // Predicated region
    $region46: #{tpu_custom_call.1} parent=1 // pred_check
      _
    $region47: #{tpu_custom_call.1} parent=1 // pred_check_branch
      %1128 = sbr.rel (0) target = $region49
    $region48: #{tpu_custom_call.1} parent=1 // pred_region
      %1129 = dma.done [#allocation6], 2048
    $region49: #{tpu_custom_call.1} parent=1 // pred_fallthru
      _
    %1130 = vsyncpa [#allocation6], 1

</llo_original>
